<compile_context>
chip_gen: v7x
topology: tpu7x:2x2x1
jax: 0.10.0
libtpu: 0.0.40
codegen_flags: <defaults>
</compile_context>

<pallas_src>
import functools

import numpy as np
import jax
import jax.numpy as jnp
from jax.experimental import pallas as pl
from jax.experimental.pallas import tpu as pltpu


def _round_up(a, b):
    return (a + b - 1) // b * b


# ----------------------------- Pallas kernel --------------------------------

def _bottleneck_kernel(x_ref, koff_ref,
                       w1_ref, b1_ref,
                       wt_ref, bt_ref,
                       w2_ref, b2_ref,
                       out_ref, *, cp, cint):
    """One tile of P pixels: all matmuls, BNs, ReLUs, unpool select, add, ReLU."""
    x = x_ref[...]                                            # (TP, Cin) bf16

    # stage 1: fused [main | ext_conv1] 1x1 conv; BN scale folded into weights
    y = jnp.dot(x, w1_ref[...], preferred_element_type=jnp.float32)
    y = y + b1_ref[...]                                       # (TP, W1) f32
    main = y[:, :cp]                                          # (TP, Cp), no ReLU
    e1 = jnp.maximum(y[:, cp:cp + cint], 0.0)                 # (TP, Cint)

    # stage 2: ConvTranspose2d(k=2, s=2) == one matmul over 4 packed offsets
    et = jnp.dot(e1.astype(jnp.bfloat16), wt_ref[...],
                 preferred_element_type=jnp.float32)
    et = jnp.maximum(et + bt_ref[...], 0.0)                   # (TP, 4*Cint)

    # stage 3 + MaxUnpool one-hot select + residual add + output ReLU, per
    # (dh, dw) offset block k; single lane-dense store of the (TP, 4*Cp) slab.
    koff = koff_ref[...].astype(jnp.int32)                    # (TP, Cp)
    w2 = w2_ref[...]
    b2 = b2_ref[...]
    blocks = []
    for k in range(4):
        et_k = et[:, k * cint:(k + 1) * cint].astype(jnp.bfloat16)
        ext_k = jnp.dot(et_k, w2, preferred_element_type=jnp.float32)
        ext_k = jnp.maximum(ext_k + b2, 0.0)                  # (TP, Cp)
        unpool_k = jnp.where(koff == k, main, 0.0)            # MaxUnpool fill-0
        blocks.append(jnp.maximum(unpool_k + ext_k, 0.0))
    out_ref[...] = jnp.concatenate(blocks, axis=1).astype(out_ref.dtype)


# ------------------------------ wrapper --------------------------------------

def en_upsampling_bottleneck(x_nchw, max_indices, params, tile_p=1024):
    N, Cin, H, W = x_nchw.shape
    Cout = params["w_main"].shape[1]
    Cint = params["w_e1"].shape[1]
    OH, OW = 2 * H, 2 * W
    P = N * H * W

    f32, bf16 = jnp.float32, jnp.bfloat16

    # --- tiling / padding ---
    Cp = _round_up(Cout, 32)               # 4*Cp is a multiple of 128 lanes
    S = 4 * Cp                             # output slab width
    W1 = _round_up(Cp + Cint, 128)         # packed stage-1 width, 128-lane mult
    # ensure >= 2 grid steps when P allows (v7x has 2 TensorCores per chip)
    tp = max(32, min(tile_p, _round_up((P + 1) // 2, 32)))
    P_pad = _round_up(P, tp)

    # --- pack weights / folded BN (host side, once); scales folded into W ---
    w1 = jnp.zeros((Cin, W1), f32)
    w1 = w1.at[:, :Cout].set(params["w_main"] * params["s_main"][None, :])
    w1 = w1.at[:, Cp:Cp + Cint].set(params["w_e1"] * params["s1"][None, :])
    b1 = jnp.zeros((W1,), f32)
    b1 = b1.at[:Cout].set(params["b_main"]).at[Cp:Cp + Cint].set(params["b1"])

    # (Cin=Cint, Cout=Cint, 2, 2) -> (Cint, 4*Cint), column block k = 2*dh+dw
    wt = jnp.transpose(params["w_t"] * params["st"][None, :, None, None],
                       (0, 2, 3, 1)).reshape(Cint, 4 * Cint)
    bt = jnp.tile(params["bt"], 4)

    w2 = jnp.zeros((Cint, Cp), f32).at[:, :Cout].set(
        params["w_e2"] * params["s2"][None, :])
    b2 = jnp.zeros((Cp,), f32).at[:Cout].set(params["b2"])

    row = lambda v: v.reshape(1, -1).astype(f32)

    # --- inputs: channels-last bf16 pixels + compact int8 unpool offsets ---
    x_flat = jnp.transpose(x_nchw.astype(bf16), (0, 2, 3, 1)).reshape(P, Cin)
    x_flat = jnp.pad(x_flat, ((0, P_pad - P), (0, 0)))

    # offset of each max inside its 2x2 cell (paired MaxPool2d(2) convention)
    koff = (2 * ((max_indices // OW) % 2) + (max_indices % 2)).astype(jnp.int8)
    koff = jnp.transpose(koff, (0, 2, 3, 1)).reshape(P, Cout)
    koff = jnp.pad(koff, ((0, P_pad - P), (0, Cp - Cout)))

    def full(shape):
        return pl.BlockSpec(shape, lambda i, n=len(shape): (0,) * n)

    out_slab = pl.pallas_call(
        functools.partial(_bottleneck_kernel, cp=Cp, cint=Cint),
        grid=(P_pad // tp,),
        in_specs=[
            pl.BlockSpec((tp, Cin), lambda i: (i, 0)),
            pl.BlockSpec((tp, Cp), lambda i: (i, 0)),
            full((Cin, W1)), full((1, W1)),
            full((Cint, 4 * Cint)), full((1, 4 * Cint)),
            full((Cint, Cp)), full((1, Cp)),
        ],
        out_specs=pl.BlockSpec((tp, S), lambda i: (i, 0)),
        out_shape=jax.ShapeDtypeStruct((P_pad, S), bf16),
        compiler_params=pltpu.CompilerParams(
            dimension_semantics=("parallel",),
            vmem_limit_bytes=48 * 1024 * 1024),
    )(x_flat, koff,
      w1.astype(bf16), row(b1),
      wt.astype(bf16), row(bt),
      w2.astype(bf16), row(b2))

    # --- module-boundary layout only: slab -> NCHW upsampled output ---
    # (slice channels first, stay bf16 through reshape/transpose, cast last)
    out = out_slab[:P].reshape(N, H, W, 2, 2, Cp)[..., :Cout]
    out = out.transpose(0, 5, 1, 3, 2, 4).reshape(N, Cout, OH, OW)
    return out.astype(f32)


# -------------------------- deterministic init --------------------------------

def init_params(key, Cin, Cout, Cint, eps=1e-5):
    ks = jax.random.split(key, 8)

    def bn(k, c):
        k1, k2, k3, k4 = jax.random.split(k, 4)
        gamma = jax.random.uniform(k1, (c,), minval=0.5, maxval=1.5)
        beta = 0.1 * jax.random.normal(k2, (c,))
        mean = 0.1 * jax.random.normal(k3, (c,))
        var = jax.random.uniform(k4, (c,), minval=0.5, maxval=1.5)
        s = gamma / jnp.sqrt(var + eps)
        return s, beta - mean * s

    s_main, b_main = bn(ks[0], Cout)
    s1, b1 = bn(ks[1], Cint)
    st, bt = bn(ks[2], Cint)
    s2, b2 = bn(ks[3], Cout)
    params = dict(
        w_main=0.2 * jax.random.normal(ks[4], (Cin, Cout)),
        w_e1=0.2 * jax.random.normal(ks[5], (Cin, Cint)),
        w_t=0.2 * jax.random.normal(ks[6], (Cint, Cint, 2, 2)),
        w_e2=0.2 * jax.random.normal(ks[7], (Cint, Cout)),
        s_main=s_main, b_main=b_main, s1=s1, b1=b1,
        st=st, bt=bt, s2=s2, b2=b2,
    )
    return jax.tree_util.tree_map(lambda a: a.astype(jnp.float32), params)


# ------------------------------ reference ------------------------------------

def ref_forward(x, idx, p):
    N, Cin, H, W = x.shape
    Cout = p["w_main"].shape[1]
    Cint = p["w_e1"].shape[1]
    OH, OW = 2 * H, 2 * W

    def bnap(y, s, b):
        return y * s[None, :, None, None] + b[None, :, None, None]

    main = bnap(jnp.einsum("nchw,cd->ndhw", x, p["w_main"]),
                p["s_main"], p["b_main"])
    up = jnp.zeros((N, Cout, OH * OW), jnp.float32).at[
        jnp.arange(N)[:, None, None], jnp.arange(Cout)[None, :, None],
        idx.reshape(N, Cout, H * W)
    ].set(main.reshape(N, Cout, H * W)).reshape(N, Cout, OH, OW)

    e1 = jax.nn.relu(bnap(jnp.einsum("nchw,cd->ndhw", x, p["w_e1"]),
                          p["s1"], p["b1"]))
    et = jnp.einsum("nchw,cdij->ndhiwj", e1, p["w_t"]).reshape(N, Cint, OH, OW)
    et = jax.nn.relu(bnap(et, p["st"], p["bt"]))
    e2 = jax.nn.relu(bnap(jnp.einsum("nchw,cd->ndhw", et, p["w_e2"]),
                          p["s2"], p["b2"]))
    return jax.nn.relu(up + e2)


# -------------------------------- main ----------------------------------------

if __name__ == "__main__":
    key = jax.random.PRNGKey(0)
    N, Cin, H, W = 2, 16, 8, 8
    internal_ratio = 4
    Cout, Cint = 8, Cin // internal_ratio

    kx, kidx, kp = jax.random.split(key, 3)
    x = jax.random.normal(kx, (N, Cin, H, W), jnp.float32)

    # synthetic MaxPool2d(k=2) indices: one position inside each 2x2 window of
    # the (2H, 2W) output plane, flattened per (n, c) plane (PyTorch convention)
    off = jax.random.randint(kidx, (N, Cout, H, W), 0, 4)
    hh = jnp.arange(H)[None, None, :, None]
    ww = jnp.arange(W)[None, None, None, :]
    max_indices = ((2 * hh + off // 2) * (2 * W) + (2 * ww + off % 2)).astype(jnp.int32)

    params = init_params(kp, Cin, Cout, Cint)

    out = jax.block_until_ready(en_upsampling_bottleneck(x, max_indices, params))
    ref = ref_forward(x, max_indices, params)
    # bf16 I/O & weights + f32 accumulation -> loosened tolerance vs pure f32
    np.testing.assert_allclose(np.asarray(out), np.asarray(ref),
                               rtol=5e-2, atol=5e-2)
    assert out.shape == (N, Cout, 2 * H, 2 * W)
    print("KERNEL_OK")
</pallas_src>

<mosaic_0001>
module attributes {stable_mosaic.version = 11 : i64} {
  func.func @_bottleneck_kernel(%arg0: i32, %arg1: memref<64x16xbf16, #tpu.memory_space<vmem>>, %arg2: memref<64x32xi8, #tpu.memory_space<vmem>>, %arg3: memref<16x128xbf16, #tpu.memory_space<vmem>>, %arg4: memref<1x128xf32, #tpu.memory_space<vmem>>, %arg5: memref<4x16xbf16, #tpu.memory_space<vmem>>, %arg6: memref<1x16xf32, #tpu.memory_space<vmem>>, %arg7: memref<4x32xbf16, #tpu.memory_space<vmem>>, %arg8: memref<1x32xf32, #tpu.memory_space<vmem>>, %arg9: memref<64x128xbf16, #tpu.memory_space<vmem>>) attributes {dimension_semantics = [#tpu.dimension_semantics<parallel>], iteration_bounds = array<i64: 2>, scalar_prefetch = 0 : i64, scratch_operands = 0 : i64, tpu.core_type = #tpu.core_type<tc>, window_params = [{transform_indices = @transform_0, window_bounds = array<i64: 64, 16>}, {transform_indices = @transform_1, window_bounds = array<i64: 64, 32>}, {pipeline_mode = #tpu.pipeline_mode<synchronous>, transform_indices = @transform_2, window_bounds = array<i64: 16, 128>}, {pipeline_mode = #tpu.pipeline_mode<synchronous>, transform_indices = @transform_3, window_bounds = array<i64: 1, 128>}, {pipeline_mode = #tpu.pipeline_mode<synchronous>, transform_indices = @transform_4, window_bounds = array<i64: 4, 16>}, {pipeline_mode = #tpu.pipeline_mode<synchronous>, transform_indices = @transform_5, window_bounds = array<i64: 1, 16>}, {pipeline_mode = #tpu.pipeline_mode<synchronous>, transform_indices = @transform_6, window_bounds = array<i64: 4, 32>}, {pipeline_mode = #tpu.pipeline_mode<synchronous>, transform_indices = @transform_7, window_bounds = array<i64: 1, 32>}, {transform_indices = @transform_8, window_bounds = array<i64: 64, 128>}]} {
    %c0 = arith.constant 0 : index
    %c0_0 = arith.constant 0 : index
    %0 = vector.load %arg1[%c0, %c0_0] : memref<64x16xbf16, #tpu.memory_space<vmem>>, vector<64x16xbf16>
    %c0_1 = arith.constant 0 : index
    %c0_2 = arith.constant 0 : index
    %1 = vector.load %arg3[%c0_1, %c0_2] : memref<16x128xbf16, #tpu.memory_space<vmem>>, vector<16x128xbf16>
    %cst = arith.constant dense<0.000000e+00> : vector<64x128xf32>
    %2 = tpu.matmul %0, %1, %cst {dimension_numbers = #tpu.dot_dimension_numbers<[1], [0], [0], [1], [0, 0, 1, 1], [], []>} : vector<64x16xbf16>, vector<16x128xbf16>, vector<64x128xf32> -> vector<64x128xf32>
    %c0_3 = arith.constant 0 : index
    %c0_4 = arith.constant 0 : index
    %3 = vector.load %arg4[%c0_3, %c0_4] : memref<1x128xf32, #tpu.memory_space<vmem>>, vector<1x128xf32>
    %4 = vector.broadcast %3 : vector<1x128xf32> to vector<64x128xf32>
    %5 = arith.addf %2, %4 : vector<64x128xf32>
    %6 = vector.extract_strided_slice %5 {offsets = [0, 0], sizes = [64, 32], strides = [1, 1]} : vector<64x128xf32> to vector<64x32xf32>
    %7 = vector.extract_strided_slice %5 {offsets = [0, 32], sizes = [64, 4], strides = [1, 1]} : vector<64x128xf32> to vector<64x4xf32>
    %cst_5 = arith.constant 0.000000e+00 : f32
    %8 = vector.broadcast %cst_5 : f32 to vector<64x4xf32>
    %9 = arith.maximumf %7, %8 : vector<64x4xf32>
    %10 = arith.truncf %9 : vector<64x4xf32> to vector<64x4xbf16>
    %c0_6 = arith.constant 0 : index
    %c0_7 = arith.constant 0 : index
    %11 = vector.load %arg5[%c0_6, %c0_7] : memref<4x16xbf16, #tpu.memory_space<vmem>>, vector<4x16xbf16>
    %cst_8 = arith.constant dense<0.000000e+00> : vector<64x16xf32>
    %12 = tpu.matmul %10, %11, %cst_8 {dimension_numbers = #tpu.dot_dimension_numbers<[1], [0], [0], [1], [0, 0, 1, 1], [], []>} : vector<64x4xbf16>, vector<4x16xbf16>, vector<64x16xf32> -> vector<64x16xf32>
    %c0_9 = arith.constant 0 : index
    %c0_10 = arith.constant 0 : index
    %13 = vector.load %arg6[%c0_9, %c0_10] : memref<1x16xf32, #tpu.memory_space<vmem>>, vector<1x16xf32>
    %14 = vector.broadcast %13 : vector<1x16xf32> to vector<64x16xf32>
    %15 = arith.addf %12, %14 : vector<64x16xf32>
    %cst_11 = arith.constant 0.000000e+00 : f32
    %16 = vector.broadcast %cst_11 : f32 to vector<64x16xf32>
    %17 = arith.maximumf %15, %16 : vector<64x16xf32>
    %c0_12 = arith.constant 0 : index
    %c0_13 = arith.constant 0 : index
    %18 = vector.load %arg2[%c0_12, %c0_13] : memref<64x32xi8, #tpu.memory_space<vmem>>, vector<64x32xi8>
    %19 = arith.extsi %18 : vector<64x32xi8> to vector<64x32xi32>
    %c0_14 = arith.constant 0 : index
    %c0_15 = arith.constant 0 : index
    %20 = vector.load %arg7[%c0_14, %c0_15] : memref<4x32xbf16, #tpu.memory_space<vmem>>, vector<4x32xbf16>
    %c0_16 = arith.constant 0 : index
    %c0_17 = arith.constant 0 : index
    %21 = vector.load %arg8[%c0_16, %c0_17] : memref<1x32xf32, #tpu.memory_space<vmem>>, vector<1x32xf32>
    %22 = vector.extract_strided_slice %17 {offsets = [0, 0], sizes = [64, 4], strides = [1, 1]} : vector<64x16xf32> to vector<64x4xf32>
    %23 = arith.truncf %22 : vector<64x4xf32> to vector<64x4xbf16>
    %cst_18 = arith.constant dense<0.000000e+00> : vector<64x32xf32>
    %24 = tpu.matmul %23, %20, %cst_18 {dimension_numbers = #tpu.dot_dimension_numbers<[1], [0], [0], [1], [0, 0, 1, 1], [], []>} : vector<64x4xbf16>, vector<4x32xbf16>, vector<64x32xf32> -> vector<64x32xf32>
    %25 = vector.broadcast %21 : vector<1x32xf32> to vector<64x32xf32>
    %26 = arith.addf %24, %25 : vector<64x32xf32>
    %cst_19 = arith.constant 0.000000e+00 : f32
    %27 = vector.broadcast %cst_19 : f32 to vector<64x32xf32>
    %28 = arith.maximumf %26, %27 : vector<64x32xf32>
    %c0_i32 = arith.constant 0 : i32
    %29 = vector.broadcast %c0_i32 : i32 to vector<64x32xi32>
    %30 = arith.cmpi eq, %19, %29 : vector<64x32xi32>
    %cst_20 = arith.constant 0.000000e+00 : f32
    %31 = vector.broadcast %cst_20 : f32 to vector<64x32xf32>
    %32 = arith.select %30, %6, %31 : vector<64x32xi1>, vector<64x32xf32>
    %33 = arith.addf %32, %28 : vector<64x32xf32>
    %cst_21 = arith.constant 0.000000e+00 : f32
    %34 = vector.broadcast %cst_21 : f32 to vector<64x32xf32>
    %35 = arith.maximumf %33, %34 : vector<64x32xf32>
    %36 = vector.extract_strided_slice %17 {offsets = [0, 4], sizes = [64, 4], strides = [1, 1]} : vector<64x16xf32> to vector<64x4xf32>
    %37 = arith.truncf %36 : vector<64x4xf32> to vector<64x4xbf16>
    %cst_22 = arith.constant dense<0.000000e+00> : vector<64x32xf32>
    %38 = tpu.matmul %37, %20, %cst_22 {dimension_numbers = #tpu.dot_dimension_numbers<[1], [0], [0], [1], [0, 0, 1, 1], [], []>} : vector<64x4xbf16>, vector<4x32xbf16>, vector<64x32xf32> -> vector<64x32xf32>
    %39 = vector.broadcast %21 : vector<1x32xf32> to vector<64x32xf32>
    %40 = arith.addf %38, %39 : vector<64x32xf32>
    %cst_23 = arith.constant 0.000000e+00 : f32
    %41 = vector.broadcast %cst_23 : f32 to vector<64x32xf32>
    %42 = arith.maximumf %40, %41 : vector<64x32xf32>
    %c1_i32 = arith.constant 1 : i32
    %43 = vector.broadcast %c1_i32 : i32 to vector<64x32xi32>
    %44 = arith.cmpi eq, %19, %43 : vector<64x32xi32>
    %cst_24 = arith.constant 0.000000e+00 : f32
    %45 = vector.broadcast %cst_24 : f32 to vector<64x32xf32>
    %46 = arith.select %44, %6, %45 : vector<64x32xi1>, vector<64x32xf32>
    %47 = arith.addf %46, %42 : vector<64x32xf32>
    %cst_25 = arith.constant 0.000000e+00 : f32
    %48 = vector.broadcast %cst_25 : f32 to vector<64x32xf32>
    %49 = arith.maximumf %47, %48 : vector<64x32xf32>
    %50 = vector.extract_strided_slice %17 {offsets = [0, 8], sizes = [64, 4], strides = [1, 1]} : vector<64x16xf32> to vector<64x4xf32>
    %51 = arith.truncf %50 : vector<64x4xf32> to vector<64x4xbf16>
    %cst_26 = arith.constant dense<0.000000e+00> : vector<64x32xf32>
    %52 = tpu.matmul %51, %20, %cst_26 {dimension_numbers = #tpu.dot_dimension_numbers<[1], [0], [0], [1], [0, 0, 1, 1], [], []>} : vector<64x4xbf16>, vector<4x32xbf16>, vector<64x32xf32> -> vector<64x32xf32>
    %53 = vector.broadcast %21 : vector<1x32xf32> to vector<64x32xf32>
    %54 = arith.addf %52, %53 : vector<64x32xf32>
    %cst_27 = arith.constant 0.000000e+00 : f32
    %55 = vector.broadcast %cst_27 : f32 to vector<64x32xf32>
    %56 = arith.maximumf %54, %55 : vector<64x32xf32>
    %c2_i32 = arith.constant 2 : i32
    %57 = vector.broadcast %c2_i32 : i32 to vector<64x32xi32>
    %58 = arith.cmpi eq, %19, %57 : vector<64x32xi32>
    %cst_28 = arith.constant 0.000000e+00 : f32
    %59 = vector.broadcast %cst_28 : f32 to vector<64x32xf32>
    %60 = arith.select %58, %6, %59 : vector<64x32xi1>, vector<64x32xf32>
    %61 = arith.addf %60, %56 : vector<64x32xf32>
    %cst_29 = arith.constant 0.000000e+00 : f32
    %62 = vector.broadcast %cst_29 : f32 to vector<64x32xf32>
    %63 = arith.maximumf %61, %62 : vector<64x32xf32>
    %64 = vector.extract_strided_slice %17 {offsets = [0, 12], sizes = [64, 4], strides = [1, 1]} : vector<64x16xf32> to vector<64x4xf32>
    %65 = arith.truncf %64 : vector<64x4xf32> to vector<64x4xbf16>
    %cst_30 = arith.constant dense<0.000000e+00> : vector<64x32xf32>
    %66 = tpu.matmul %65, %20, %cst_30 {dimension_numbers = #tpu.dot_dimension_numbers<[1], [0], [0], [1], [0, 0, 1, 1], [], []>} : vector<64x4xbf16>, vector<4x32xbf16>, vector<64x32xf32> -> vector<64x32xf32>
    %67 = vector.broadcast %21 : vector<1x32xf32> to vector<64x32xf32>
    %68 = arith.addf %66, %67 : vector<64x32xf32>
    %cst_31 = arith.constant 0.000000e+00 : f32
    %69 = vector.broadcast %cst_31 : f32 to vector<64x32xf32>
    %70 = arith.maximumf %68, %69 : vector<64x32xf32>
    %c3_i32 = arith.constant 3 : i32
    %71 = vector.broadcast %c3_i32 : i32 to vector<64x32xi32>
    %72 = arith.cmpi eq, %19, %71 : vector<64x32xi32>
    %cst_32 = arith.constant 0.000000e+00 : f32
    %73 = vector.broadcast %cst_32 : f32 to vector<64x32xf32>
    %74 = arith.select %72, %6, %73 : vector<64x32xi1>, vector<64x32xf32>
    %75 = arith.addf %74, %70 : vector<64x32xf32>
    %cst_33 = arith.constant 0.000000e+00 : f32
    %76 = vector.broadcast %cst_33 : f32 to vector<64x32xf32>
    %77 = arith.maximumf %75, %76 : vector<64x32xf32>
    %78 = tpu.concatenate %35, %49, %63, %77 in 1 : vector<64x32xf32>, vector<64x32xf32>, vector<64x32xf32>, vector<64x32xf32> -> vector<64x128xf32>
    %79 = arith.truncf %78 : vector<64x128xf32> to vector<64x128xbf16>
    %c0_34 = arith.constant 0 : index
    %c0_35 = arith.constant 0 : index
    %80 = vector.load %arg9[%c0_34, %c0_35] : memref<64x128xbf16, #tpu.memory_space<vmem>>, vector<64x128xbf16>
    tpu.vector_store %arg9[%c0_34, %c0_35], %79 {strides = array<i32>} : memref<64x128xbf16, #tpu.memory_space<vmem>>, vector<64x128xbf16>,
    return
  }
  func.func @transform_0(%arg0: i32) -> (i32, i32) {
    %c0_i32 = arith.constant 0 : i32
    %c0_i32_0 = arith.constant 0 : i32
    return %arg0, %c0_i32 : i32, i32
  }
  func.func @transform_1(%arg0: i32) -> (i32, i32) {
    %c0_i32 = arith.constant 0 : i32
    %c0_i32_0 = arith.constant 0 : i32
    return %arg0, %c0_i32 : i32, i32
  }
  func.func @transform_2(%arg0: i32) -> (i32, i32) {
    %c0_i32 = arith.constant 0 : i32
    %c0_i32_0 = arith.constant 0 : i32
    %c0_i32_1 = arith.constant 0 : i32
    return %c0_i32, %c0_i32_0 : i32, i32
  }
  func.func @transform_3(%arg0: i32) -> (i32, i32) {
    %c0_i32 = arith.constant 0 : i32
    %c0_i32_0 = arith.constant 0 : i32
    %c0_i32_1 = arith.constant 0 : i32
    return %c0_i32, %c0_i32_0 : i32, i32
  }
  func.func @transform_4(%arg0: i32) -> (i32, i32) {
    %c0_i32 = arith.constant 0 : i32
    %c0_i32_0 = arith.constant 0 : i32
    %c0_i32_1 = arith.constant 0 : i32
    return %c0_i32, %c0_i32_0 : i32, i32
  }
  func.func @transform_5(%arg0: i32) -> (i32, i32) {
    %c0_i32 = arith.constant 0 : i32
    %c0_i32_0 = arith.constant 0 : i32
    %c0_i32_1 = arith.constant 0 : i32
    return %c0_i32, %c0_i32_0 : i32, i32
  }
  func.func @transform_6(%arg0: i32) -> (i32, i32) {
    %c0_i32 = arith.constant 0 : i32
    %c0_i32_0 = arith.constant 0 : i32
    %c0_i32_1 = arith.constant 0 : i32
    return %c0_i32, %c0_i32_0 : i32, i32
  }
  func.func @transform_7(%arg0: i32) -> (i32, i32) {
    %c0_i32 = arith.constant 0 : i32
    %c0_i32_0 = arith.constant 0 : i32
    %c0_i32_1 = arith.constant 0 : i32
    return %c0_i32, %c0_i32_0 : i32, i32
  }
  func.func @transform_8(%arg0: i32) -> (i32, i32) {
    %c0_i32 = arith.constant 0 : i32
    %c0_i32_0 = arith.constant 0 : i32
    return %arg0, %c0_i32 : i32, i32
  }
}

</mosaic_0001>

<llo_original>
// kernel: tpu_custom_call.1
$region0: #{tpu_custom_call.1}
  #allocation0 [shape = 'u32[]', space=smem, size = 0x4, offset = 0x4, fixed_abs, tag = 'smem constant byte address 0x4 - core index']
  #allocation1 [shape = 'u32[144,128]{1,0:T(1,128)}', space=vmem, size = 0x12000, scoped, tag = 'internal scratch']
  %s0 = inlined_call_operand.vmem [shape: bf16[128,16], index: 0, kind: input, shape index: {}]
  %s1 = inlined_call_operand.vmem [shape: s8[128,32], index: 1, kind: input, shape index: {}]
  %s2 = inlined_call_operand.vmem [shape: bf16[16,128], index: 2, kind: input, shape index: {}]
  %s3 = inlined_call_operand.vmem [shape: f32[1,128], index: 3, kind: input, shape index: {}]
  %s4 = inlined_call_operand.vmem [shape: bf16[4,16], index: 4, kind: input, shape index: {}]
  %s5 = inlined_call_operand.vmem [shape: f32[1,16], index: 5, kind: input, shape index: {}]
  %s6 = inlined_call_operand.vmem [shape: bf16[4,32], index: 6, kind: input, shape index: {}]
  %s7 = inlined_call_operand.vmem [shape: f32[1,32], index: 7, kind: input, shape index: {}]
  %s8 = inlined_call_operand.hbm [shape: bf16[128,128], index: 8, kind: output, shape index: {}]
  %s9 = sld [smem:[#allocation0]]
  $region65: #{tpu_custom_call.1} parent=0
    _
  %s11 = ssub.s32 1, %s9
  %s12 = scalar_select 0, %s11, %s9
  $region1: #{tpu_custom_call.1} parent=0
    #allocation2 [shape = 'u8[32768]{0}', space=vmem, size = 0x8000, scoped, tag = 'output window, operand 0']
    #allocation3 [shape = 's32[2]{0}', space=sflag, size = 0x8, scoped, tag = 'scoped memory for tpu_custom_call.1']
    %13 = vsyncpa [#allocation3], 0
    %s14 = scalar_lea.sflag [#allocation3], 1
    %15 = vsyncpa %s14, 0
    loop: start=0, step=1, limit=4
    $region2: #{tpu_custom_call.1} parent=1 // loop_pre_header
      _
    $region3: #{tpu_custom_call.1} parent=1 // loop_header
      %s17 = sphi 0, %s21
      %p18 = scmp.ge.s32.totalorder %s17, 4
      %s27 = sphi 0, %s29
      %s30 = sphi 0, %s27
      %s31 = sphi 0, %s30
      %s47 = sphi 0, %s31
      %s53 = sphi 0, %s55
      %s56 = sphi 0, %s53
      %s57 = sphi 0, %s56
      %s73 = sphi 0, %s57
      %s77 = sphi 0, %s77
      %s79 = sphi 0, %s77
      %s80 = sphi 0, %s79
      %s94 = sphi 0, %s80
      %s98 = sphi 0, %s98
      %s100 = sphi 0, %s98
      %s101 = sphi 0, %s100
      %s115 = sphi 0, %s101
      %s119 = sphi 0, %s119
      %s121 = sphi 0, %s119
      %s122 = sphi 0, %s121
      %s136 = sphi 0, %s122
      %s140 = sphi 0, %s140
      %s142 = sphi 0, %s140
      %s143 = sphi 0, %s142
      %s157 = sphi 0, %s143
      %s161 = sphi 0, %s161
      %s163 = sphi 0, %s161
      %s164 = sphi 0, %s163
      %s178 = sphi 0, %s164
      %s182 = sphi 0, %s182
      %s184 = sphi 0, %s182
      %s185 = sphi 0, %s184
      %s199 = sphi 0, %s185
      %s205 = sphi 0, %s207
      %s208 = sphi 0, %s205
      %s209 = sphi 0, %s208
      %s225 = sphi 0, %s209
    $region4: #{tpu_custom_call.1} parent=1 // loop_header_branch
      %20 = sbr.rel (%p18) target = $region8
    $region5: #{tpu_custom_call.1} parent=1 // loop_body
      %s22 = ssub.s32 %s17, 1
      %s23 = ssub.s32 %s17, 2
      %s24 = sadd.s32 %s17, 1
      %s25 = ssub.s32 %s17, %s24
      %p26 = scmp.eq.s32.totalorder %s25, 0
      %s28 = sadd.s32 %s27, 1
      %s29 = scalar_select %p26, %s27, %s28
      %p32 = pneg %p26
      %p33 = scmp.eq.s32.totalorder %s17, 1
      %p34 = por %p32, %p33
      %p35 = scmp.ne.s32.totalorder %s27, %s30
      %p36 = scmp.eq.s32.totalorder %s17, 0
      %p37 = por %p35, %p36
      %p38 = scmp.ne.s32.totalorder %s27, %s30
      %p39 = scmp.eq.s32.totalorder %s22, 1
      %p40 = por %p38, %p39
      %p41 = scmp.ne.s32.totalorder %s30, %s31
      %p42 = scmp.eq.s32.totalorder %s22, 0
      %p43 = por %p41, %p42
      %p44 = scmp.ne.s32.totalorder %s30, %s31
      %p45 = scmp.eq.s32.totalorder %s23, 1
      %p46 = por %p44, %p45
      %p48 = scmp.ne.s32.totalorder %s31, %s47
      %p49 = scmp.eq.s32.totalorder %s23, 0
      %p50 = por %p48, %p49
      %s51 = ssub.s32 %s17, %s24
      %p52 = scmp.eq.s32.totalorder %s51, 0
      %s54 = sadd.s32 %s53, 1
      %s55 = scalar_select %p52, %s53, %s54
      %p58 = pneg %p52
      %p59 = scmp.eq.s32.totalorder %s17, 1
      %p60 = por %p58, %p59
      %p61 = scmp.ne.s32.totalorder %s53, %s56
      %p62 = scmp.eq.s32.totalorder %s17, 0
      %p63 = por %p61, %p62
      %p64 = scmp.ne.s32.totalorder %s53, %s56
      %p65 = scmp.eq.s32.totalorder %s22, 1
      %p66 = por %p64, %p65
      %p67 = scmp.ne.s32.totalorder %s56, %s57
      %p68 = scmp.eq.s32.totalorder %s22, 0
      %p69 = por %p67, %p68
      %p70 = scmp.ne.s32.totalorder %s56, %s57
      %p71 = scmp.eq.s32.totalorder %s23, 1
      %p72 = por %p70, %p71
      %p74 = scmp.ne.s32.totalorder %s57, %s73
      %p75 = scmp.eq.s32.totalorder %s23, 0
      %p76 = por %p74, %p75
      %s78 = sadd.s32 %s77, 1
      %p81 = scmp.eq.s32.totalorder %s17, 1
      %p82 = scmp.ne.s32.totalorder %s77, %s79
      %p83 = scmp.eq.s32.totalorder %s17, 0
      %p84 = por %p82, %p83
      %p85 = scmp.ne.s32.totalorder %s77, %s79
      %p86 = scmp.eq.s32.totalorder %s22, 1
      %p87 = por %p85, %p86
      %p88 = scmp.ne.s32.totalorder %s79, %s80
      %p89 = scmp.eq.s32.totalorder %s22, 0
      %p90 = por %p88, %p89
      %p91 = scmp.ne.s32.totalorder %s79, %s80
      %p92 = scmp.eq.s32.totalorder %s23, 1
      %p93 = por %p91, %p92
      %p95 = scmp.ne.s32.totalorder %s80, %s94
      %p96 = scmp.eq.s32.totalorder %s23, 0
      %p97 = por %p95, %p96
      %s99 = sadd.s32 %s98, 1
      %p102 = scmp.eq.s32.totalorder %s17, 1
      %p103 = scmp.ne.s32.totalorder %s98, %s100
      %p104 = scmp.eq.s32.totalorder %s17, 0
      %p105 = por %p103, %p104
      %p106 = scmp.ne.s32.totalorder %s98, %s100
      %p107 = scmp.eq.s32.totalorder %s22, 1
      %p108 = por %p106, %p107
      %p109 = scmp.ne.s32.totalorder %s100, %s101
      %p110 = scmp.eq.s32.totalorder %s22, 0
      %p111 = por %p109, %p110
      %p112 = scmp.ne.s32.totalorder %s100, %s101
      %p113 = scmp.eq.s32.totalorder %s23, 1
      %p114 = por %p112, %p113
      %p116 = scmp.ne.s32.totalorder %s101, %s115
      %p117 = scmp.eq.s32.totalorder %s23, 0
      %p118 = por %p116, %p117
      %s120 = sadd.s32 %s119, 1
      %p123 = scmp.eq.s32.totalorder %s17, 1
      %p124 = scmp.ne.s32.totalorder %s119, %s121
      %p125 = scmp.eq.s32.totalorder %s17, 0
      %p126 = por %p124, %p125
      %p127 = scmp.ne.s32.totalorder %s119, %s121
      %p128 = scmp.eq.s32.totalorder %s22, 1
      %p129 = por %p127, %p128
      %p130 = scmp.ne.s32.totalorder %s121, %s122
      %p131 = scmp.eq.s32.totalorder %s22, 0
      %p132 = por %p130, %p131
      %p133 = scmp.ne.s32.totalorder %s121, %s122
      %p134 = scmp.eq.s32.totalorder %s23, 1
      %p135 = por %p133, %p134
      %p137 = scmp.ne.s32.totalorder %s122, %s136
      %p138 = scmp.eq.s32.totalorder %s23, 0
      %p139 = por %p137, %p138
      %s141 = sadd.s32 %s140, 1
      %p144 = scmp.eq.s32.totalorder %s17, 1
      %p145 = scmp.ne.s32.totalorder %s140, %s142
      %p146 = scmp.eq.s32.totalorder %s17, 0
      %p147 = por %p145, %p146
      %p148 = scmp.ne.s32.totalorder %s140, %s142
      %p149 = scmp.eq.s32.totalorder %s22, 1
      %p150 = por %p148, %p149
      %p151 = scmp.ne.s32.totalorder %s142, %s143
      %p152 = scmp.eq.s32.totalorder %s22, 0
      %p153 = por %p151, %p152
      %p154 = scmp.ne.s32.totalorder %s142, %s143
      %p155 = scmp.eq.s32.totalorder %s23, 1
      %p156 = por %p154, %p155
      %p158 = scmp.ne.s32.totalorder %s143, %s157
      %p159 = scmp.eq.s32.totalorder %s23, 0
      %p160 = por %p158, %p159
      %s162 = sadd.s32 %s161, 1
      %p165 = scmp.eq.s32.totalorder %s17, 1
      %p166 = scmp.ne.s32.totalorder %s161, %s163
      %p167 = scmp.eq.s32.totalorder %s17, 0
      %p168 = por %p166, %p167
      %p169 = scmp.ne.s32.totalorder %s161, %s163
      %p170 = scmp.eq.s32.totalorder %s22, 1
      %p171 = por %p169, %p170
      %p172 = scmp.ne.s32.totalorder %s163, %s164
      %p173 = scmp.eq.s32.totalorder %s22, 0
      %p174 = por %p172, %p173
      %p175 = scmp.ne.s32.totalorder %s163, %s164
      %p176 = scmp.eq.s32.totalorder %s23, 1
      %p177 = por %p175, %p176
      %p179 = scmp.ne.s32.totalorder %s164, %s178
      %p180 = scmp.eq.s32.totalorder %s23, 0
      %p181 = por %p179, %p180
      %s183 = sadd.s32 %s182, 1
      %p186 = scmp.eq.s32.totalorder %s17, 1
      %p187 = scmp.ne.s32.totalorder %s182, %s184
      %p188 = scmp.eq.s32.totalorder %s17, 0
      %p189 = por %p187, %p188
      %p190 = scmp.ne.s32.totalorder %s182, %s184
      %p191 = scmp.eq.s32.totalorder %s22, 1
      %p192 = por %p190, %p191
      %p193 = scmp.ne.s32.totalorder %s184, %s185
      %p194 = scmp.eq.s32.totalorder %s22, 0
      %p195 = por %p193, %p194
      %p196 = scmp.ne.s32.totalorder %s184, %s185
      %p197 = scmp.eq.s32.totalorder %s23, 1
      %p198 = por %p196, %p197
      %p200 = scmp.ne.s32.totalorder %s185, %s199
      %p201 = scmp.eq.s32.totalorder %s23, 0
      %p202 = por %p200, %p201
      %s203 = ssub.s32 %s17, %s24
      %p204 = scmp.eq.s32.totalorder %s203, 0
      %s206 = sadd.s32 %s205, 1
      %s207 = scalar_select %p204, %s205, %s206
      %p210 = pneg %p204
      %p211 = scmp.eq.s32.totalorder %s17, 1
      %p212 = por %p210, %p211
      %p213 = scmp.ne.s32.totalorder %s205, %s208
      %p214 = scmp.eq.s32.totalorder %s17, 0
      %p215 = por %p213, %p214
      %p216 = scmp.ne.s32.totalorder %s205, %s208
      %p217 = scmp.eq.s32.totalorder %s22, 1
      %p218 = por %p216, %p217
      %p219 = scmp.ne.s32.totalorder %s208, %s209
      %p220 = scmp.eq.s32.totalorder %s22, 0
      %p221 = por %p219, %p220
      %p222 = scmp.ne.s32.totalorder %s208, %s209
      %p223 = scmp.eq.s32.totalorder %s23, 1
      %p224 = por %p222, %p223
      %p226 = scmp.ne.s32.totalorder %s209, %s225
      %p227 = scmp.eq.s32.totalorder %s23, 0
      %p228 = por %p226, %p227
      %p229 = scmp.le.s32.totalorder 1, %s17
      %p230 = scmp.lt.s32.totalorder %s17, 3
      %p231 = pnand %p229, %p230
      %p232 = pneg %p231
      // Predicated region
      $region9: #{tpu_custom_call.1} parent=5 // pred_check
        _
      $region10: #{tpu_custom_call.1} parent=5 // pred_check_branch
        %234 = sbr.rel (%p231) target = $region12
      $region11: #{tpu_custom_call.1} parent=5 // pred_region
        %s235 = ssub.s32 %s17, 1
        // Predicated region
        $region13: #{tpu_custom_call.1} parent=11 // pred_check
          %p236 = pneg %p90
        $region14: #{tpu_custom_call.1} parent=11 // pred_check_branch
          %238 = sbr.rel (%p236) target = $region16
        $region15: #{tpu_custom_call.1} parent=11 // pred_region
          _
        $region16: #{tpu_custom_call.1} parent=11 // pred_fallthru
          _
        // Predicated region
        $region17: #{tpu_custom_call.1} parent=11 // pred_check
          %p239 = pneg %p111
        $region18: #{tpu_custom_call.1} parent=11 // pred_check_branch
          %241 = sbr.rel (%p239) target = $region20
        $region19: #{tpu_custom_call.1} parent=11 // pred_region
          _
        $region20: #{tpu_custom_call.1} parent=11 // pred_fallthru
          _
        // Predicated region
        $region21: #{tpu_custom_call.1} parent=11 // pred_check
          %p242 = pneg %p132
        $region22: #{tpu_custom_call.1} parent=11 // pred_check_branch
          %244 = sbr.rel (%p242) target = $region24
        $region23: #{tpu_custom_call.1} parent=11 // pred_region
          _
        $region24: #{tpu_custom_call.1} parent=11 // pred_fallthru
          _
        // Predicated region
        $region25: #{tpu_custom_call.1} parent=11 // pred_check
          %p245 = pneg %p153
        $region26: #{tpu_custom_call.1} parent=11 // pred_check_branch
          %247 = sbr.rel (%p245) target = $region28
        $region27: #{tpu_custom_call.1} parent=11 // pred_region
          _
        $region28: #{tpu_custom_call.1} parent=11 // pred_fallthru
          _
        // Predicated region
        $region29: #{tpu_custom_call.1} parent=11 // pred_check
          %p248 = pneg %p174
        $region30: #{tpu_custom_call.1} parent=11 // pred_check_branch
          %250 = sbr.rel (%p248) target = $region32
        $region31: #{tpu_custom_call.1} parent=11 // pred_region
          _
        $region32: #{tpu_custom_call.1} parent=11 // pred_fallthru
          _
        // Predicated region
        $region33: #{tpu_custom_call.1} parent=11 // pred_check
          %p251 = pneg %p195
        $region34: #{tpu_custom_call.1} parent=11 // pred_check_branch
          %253 = sbr.rel (%p251) target = $region36
        $region35: #{tpu_custom_call.1} parent=11 // pred_region
          _
        $region36: #{tpu_custom_call.1} parent=11 // pred_fallthru
          _
      $region12: #{tpu_custom_call.1} parent=5 // pred_fallthru
        _
      %p254 = scmp.lt.s32.totalorder %s17, 2
      // Predicated region
      $region37: #{tpu_custom_call.1} parent=5 // pred_check
        %p255 = pneg %p254
      $region38: #{tpu_custom_call.1} parent=5 // pred_check_branch
        %257 = sbr.rel (%p255) target = $region40
      $region39: #{tpu_custom_call.1} parent=5 // pred_region
        // Predicated region
        $region41: #{tpu_custom_call.1} parent=39 // pred_check
          %p258 = pneg %p37
        $region42: #{tpu_custom_call.1} parent=39 // pred_check_branch
          %260 = sbr.rel (%p258) target = $region44
        $region43: #{tpu_custom_call.1} parent=39 // pred_region
          %s261 = smul.u32 8, %s17
          %p262 = scmp.lt.s32.totalorder %s261, 15
          %s263 = scalar_select %p262, %s261, 15
          %s264 = smul.addr %s263, 4
          %s265 = scalar_lea.vmem %s0, %s264
          %s266 = smul.u32 8, %s17
        $region44: #{tpu_custom_call.1} parent=39 // pred_fallthru
          _
        // Predicated region
        $region45: #{tpu_custom_call.1} parent=39 // pred_check
          %p267 = pneg %p63
        $region46: #{tpu_custom_call.1} parent=39 // pred_check_branch
          %269 = sbr.rel (%p267) target = $region48
        $region47: #{tpu_custom_call.1} parent=39 // pred_region
          %s270 = smul.u32 2, %s17
          %p271 = scmp.lt.s32.totalorder %s270, 3
          %s272 = scalar_select %p271, %s270, 3
          %s273 = smul.addr %s272, 8
          %s274 = scalar_lea.vmem %s1, %s273
          %s275 = smul.u32 2, %s17
        $region48: #{tpu_custom_call.1} parent=39 // pred_fallthru
          _
      $region40: #{tpu_custom_call.1} parent=5 // pred_fallthru
        _
      %p276 = scmp.le.s32.totalorder 1, %s17
      %p277 = scmp.lt.s32.totalorder %s17, 3
      %p278 = pnand %p276, %p277
      %p279 = pneg %p278
      // Predicated region
      $region49: #{tpu_custom_call.1} parent=5 // pred_check
        _
      $region50: #{tpu_custom_call.1} parent=5 // pred_check_branch
        %281 = sbr.rel (%p278) target = $region52
      $region51: #{tpu_custom_call.1} parent=5 // pred_region
        %s282 = ssub.s32 %s17, 1
        %s283 = smul.u32 8, %s22
        %p284 = scmp.lt.s32.totalorder %s283, 15
        %s285 = scalar_select %p284, %s283, 15
        %s286 = smul.addr %s285, 4
        %s287 = scalar_lea.vmem %s0, %s286
        %p288 = pneg %p43
        %p289 = pneg %p40
        %s290 = smul.u32 2, %s22
        %p291 = scmp.lt.s32.totalorder %s290, 3
        %s292 = scalar_select %p291, %s290, 3
        %s293 = smul.addr %s292, 8
        %s294 = scalar_lea.vmem %s1, %s293
        %p295 = pneg %p69
        %p296 = pneg %p66
        %p297 = pneg %p90
        %p298 = pneg %p87
        %p299 = pneg %p111
        %p300 = pneg %p108
        %p301 = pneg %p132
        %p302 = pneg %p129
        %p303 = pneg %p153
        %p304 = pneg %p150
        %p305 = pneg %p174
        %p306 = pneg %p171
        %p307 = pneg %p195
        %p308 = pneg %p192
        %p309 = pneg %p221
        %p310 = pneg %p218
        %s311 = sand.u32 %s208, 1
        %s312 = scalar_lea.sflag [#allocation3], %s311
        %s313 = sand.u32 %s208, 1
        %s314 = smul.addr %s313, 32
        %s315 = scalar_lea.vmem [#allocation2], %s314
        %s316 = smul.u32 8, %s22
        %p317 = scmp.lt.s32.totalorder %s316, 15
        %s318 = scalar_select %p317, %s316, 15
        %s319 = smul.addr %s318, 4
        %s320 = scalar_lea.vmem %s0, %s319
        %s321 = smul.u32 8, %s22
        %s322 = smul.u32 2, %s22
        %p323 = scmp.lt.s32.totalorder %s322, 3
        %s324 = scalar_select %p323, %s322, 3
        %s325 = smul.addr %s324, 8
        %s326 = scalar_lea.vmem %s1, %s325
        %s327 = smul.u32 2, %s22
        %s328 = smul.u32 8, %s22
        %v330 = vld [vmem:[%s320] sm:$0xf]
        %v331 = vld [vmem:[%s320 + $0x4] sm:$0xf]
        %v332 = vld [vmem:[%s320 + $0x8] sm:$0xf]
        %v333 = vld [vmem:[%s320 + $0xc] sm:$0xf]
        %v334 = vld [vmem:[%s320 + $0x10] sm:$0xf]
        %v335 = vld [vmem:[%s320 + $0x14] sm:$0xf]
        %v336 = vld [vmem:[%s320 + $0x18] sm:$0xf]
        %v337 = vld [vmem:[%s320 + $0x1c] sm:$0xf]
        %v338 = vld [vmem:[%s2] sm:$0xf]
        %v339 = vld [vmem:[%s2 + $0x4] sm:$0xf]
        %v340 = vld [vmem:[%s3] sm:$0x1]
        %v342 = vlaneseq
        %v343 = vshrl.u32 %v342, 7
        %v344 = vsub.s32 0, %v343
        %v345 = vrot.slane %v340, %v344
        %v355 = vunpack.c.l.b16 %v330
        %v356 = vunpack.c.l.b16 %v331
        %v357 = vunpack.c.l.b16 %v332
        %v358 = vunpack.c.l.b16 %v333
        %v359 = vunpack.c.l.b16 %v334
        %v360 = vunpack.c.l.b16 %v335
        %v361 = vunpack.c.l.b16 %v336
        %v362 = vunpack.c.l.b16 %v337
        %v363 = vpack.c.b16 %v356, %v355
        %v364 = vpack.c.b16 %v358, %v357
        %v365 = vpack.c.b16 %v360, %v359
        %v366 = vpack.c.b16 %v362, %v361
        %v369 = vunpack.c.l.b16 %v338
        %v370 = vunpack.c.l.b16 %v339
        %v371 = vpack.c.b16 %v370, %v369
        %vm373 = vcmask 130048
        %v375 = vsel %vm373, %v363, 0
        %v378 = vsel %vm373, %v364, 0
        %v381 = vsel %vm373, %v365, 0
        %v384 = vsel %vm373, %v366, 0
        %386 = vmatprep.subr.bf16.mxu0 0
        %387 = vmatpush1.bf16.msra.mxu0 %v371
        %388 = vmatprep.subr.bf16.mxu0 0
        %389 = vmatpush1.bf16.msra.mxu0 0
        %390 = vmatprep.subr.bf16.mxu0 0
        %391 = vmatpush1.bf16.msra.mxu0 0
        %392 = vmatprep.subr.bf16.mxu0 0
        %393 = vmatpush1.bf16.msra.mxu0 0
        %394 = vmatprep.subr.bf16.mxu0 0
        %395 = vmatpush1.bf16.msra.mxu0 0
        %396 = vmatprep.subr.bf16.mxu0 0
        %397 = vmatpush1.bf16.msra.mxu0 0
        %398 = vmatprep.subr.bf16.mxu0 0
        %399 = vmatpush1.bf16.msra.mxu0 0
        %400 = vmatprep.subr.bf16.mxu0 0
        %401 = vmatpush1.bf16.msra.mxu0 0
        %402 = vmatprep.subr.bf16.mxu0 0
        %403 = vmatpush1.bf16.msra.mxu0 0
        %404 = vmatprep.subr.bf16.mxu0 0
        %405 = vmatpush1.bf16.msra.mxu0 0
        %406 = vmatprep.subr.bf16.mxu0 0
        %407 = vmatpush1.bf16.msra.mxu0 0
        %408 = vmatprep.subr.bf16.mxu0 0
        %409 = vmatpush1.bf16.msra.mxu0 0
        %410 = vmatprep.subr.bf16.mxu0 0
        %411 = vmatpush1.bf16.msra.mxu0 0
        %412 = vmatprep.subr.bf16.mxu0 0
        %413 = vmatpush1.bf16.msra.mxu0 0
        %414 = vmatprep.subr.bf16.mxu0 0
        %415 = vmatpush1.bf16.msra.mxu0 0
        %416 = vmatprep.subr.bf16.mxu0 0
        %417 = vmatpush1.bf16.msra.mxu0 0
        %418 = vmatprep.mubr.bf16.mxu0 0
        %419 = vmatmul.mubr.bf16.gmra.mrb[0].mxu0 %v375
        %v420 = vpop.f32.mrb[0].mxu0
        %v421 = vadd.f32 %v345, %v420
        %v422 = vpop.f32.mrb[0].mxu0
        %v423 = vpop.f32.mrb[0].mxu0
        %v424 = vadd.f32 %v345, %v423
        %v425 = vpop.f32.mrb[0].mxu0
        %426 = vmatprep.mubr.bf16.mxu0 0
        %427 = vmatmul.mubr.bf16.gmra.mrb[0].mxu0 %v378
        %v428 = vpop.f32.mrb[0].mxu0
        %v429 = vadd.f32 %v345, %v428
        %v430 = vpop.f32.mrb[0].mxu0
        %v431 = vpop.f32.mrb[0].mxu0
        %v432 = vadd.f32 %v345, %v431
        %v433 = vpop.f32.mrb[0].mxu0
        %434 = vmatprep.mubr.bf16.mxu0 0
        %435 = vmatmul.mubr.bf16.gmra.mrb[0].mxu0 %v381
        %v436 = vpop.f32.mrb[0].mxu0
        %v437 = vadd.f32 %v345, %v436
        %v438 = vpop.f32.mrb[0].mxu0
        %v439 = vpop.f32.mrb[0].mxu0
        %v440 = vadd.f32 %v345, %v439
        %v441 = vpop.f32.mrb[0].mxu0
        %442 = vmatprep.mubr.bf16.mxu0 0
        %443 = vmatmul.mubr.bf16.gmra.mrb[0].mxu0 %v384
        %v444 = vpop.f32.mrb[0].mxu0
        %v445 = vadd.f32 %v345, %v444
        %v446 = vpop.f32.mrb[0].mxu0
        %v447 = vpop.f32.mrb[0].mxu0
        %v448 = vadd.f32 %v345, %v447
        %v449 = vpop.f32.mrb[0].mxu0
        %450 = vdwg.mxu0
        %v451 = vmax.f32 %v421, 0.0
        %v452 = vmax.f32 %v424, 0.0
        %v453 = vmax.f32 %v429, 0.0
        %v454 = vmax.f32 %v432, 0.0
        %v455 = vmax.f32 %v437, 0.0
        %v456 = vmax.f32 %v440, 0.0
        %v457 = vmax.f32 %v445, 0.0
        %v458 = vmax.f32 %v448, 0.0
        %v459 = vpack.c.bf16 %v452, %v451
        %v460 = vpack.c.bf16 %v454, %v453
        %v461 = vpack.c.bf16 %v456, %v455
        %v462 = vpack.c.bf16 %v458, %v457
        %v463 = vld [vmem:[%s4] sm:$0x3]
        %v464 = vld [vmem:[%s5] sm:$0x1]
        %v466 = vlaneseq
        %v467 = vshrl.u32 %v466, 7
        %v468 = vsub.s32 0, %v467
        %v469 = vrot.slane %v464, %v468
        %475 = vrot.lane.b32.xlu0 %v459, 96
        %v476 = vpop.permute.xlu0 %475
        %477 = vrot.lane.b32.xlu0 %v460, 96
        %v478 = vpop.permute.xlu0 %477
        %479 = vrot.lane.b32.xlu0 %v461, 96
        %v480 = vpop.permute.xlu0 %479
        %481 = vrot.lane.b32.xlu0 %v462, 96
        %v482 = vpop.permute.xlu0 %481
        %vm483 = vcmask 31744
        %v485 = vsel %vm483, %v476, 0
        %v488 = vsel %vm483, %v478, 0
        %v491 = vsel %vm483, %v480, 0
        %v494 = vsel %vm483, %v482, 0
        %vm496 = vcmask 1041408
        %v498 = vsel %vm496, %v463, 0
        %500 = vmatprep.subr.bf16.mxu0 0
        %501 = vmatpush1.bf16.msra.mxu0 %v498
        %502 = vmatprep.subr.bf16.mxu0 0
        %503 = vmatpush1.bf16.msra.mxu0 0
        %504 = vmatprep.subr.bf16.mxu0 0
        %505 = vmatpush1.bf16.msra.mxu0 0
        %506 = vmatprep.subr.bf16.mxu0 0
        %507 = vmatpush1.bf16.msra.mxu0 0
        %508 = vmatprep.subr.bf16.mxu0 0
        %509 = vmatpush1.bf16.msra.mxu0 0
        %510 = vmatprep.subr.bf16.mxu0 0
        %511 = vmatpush1.bf16.msra.mxu0 0
        %512 = vmatprep.subr.bf16.mxu0 0
        %513 = vmatpush1.bf16.msra.mxu0 0
        %514 = vmatprep.subr.bf16.mxu0 0
        %515 = vmatpush1.bf16.msra.mxu0 0
        %516 = vmatprep.subr.bf16.mxu0 0
        %517 = vmatpush1.bf16.msra.mxu0 0
        %518 = vmatprep.subr.bf16.mxu0 0
        %519 = vmatpush1.bf16.msra.mxu0 0
        %520 = vmatprep.subr.bf16.mxu0 0
        %521 = vmatpush1.bf16.msra.mxu0 0
        %522 = vmatprep.subr.bf16.mxu0 0
        %523 = vmatpush1.bf16.msra.mxu0 0
        %524 = vmatprep.subr.bf16.mxu0 0
        %525 = vmatpush1.bf16.msra.mxu0 0
        %526 = vmatprep.subr.bf16.mxu0 0
        %527 = vmatpush1.bf16.msra.mxu0 0
        %528 = vmatprep.subr.bf16.mxu0 0
        %529 = vmatpush1.bf16.msra.mxu0 0
        %530 = vmatprep.subr.bf16.mxu0 0
        %531 = vmatpush1.bf16.msra.mxu0 0
        %532 = vmatprep.mubr.bf16.mxu0 0
        %533 = vmatmul.mubr.bf16.gmra.mrb[0].mxu0 %v485
        %v534 = vpop.f32.mrb[0].mxu0
        %v535 = vadd.f32 %v469, %v534
        %v536 = vpop.f32.mrb[0].mxu0
        %v537 = vpop.f32.mrb[0].mxu0
        %v538 = vadd.f32 %v469, %v537
        %v539 = vpop.f32.mrb[0].mxu0
        %540 = vmatprep.mubr.bf16.mxu0 0
        %541 = vmatmul.mubr.bf16.gmra.mrb[0].mxu0 %v488
        %v542 = vpop.f32.mrb[0].mxu0
        %v543 = vadd.f32 %v469, %v542
        %v544 = vpop.f32.mrb[0].mxu0
        %v545 = vpop.f32.mrb[0].mxu0
        %v546 = vadd.f32 %v469, %v545
        %v547 = vpop.f32.mrb[0].mxu0
        %548 = vmatprep.mubr.bf16.mxu0 0
        %549 = vmatmul.mubr.bf16.gmra.mrb[0].mxu0 %v491
        %v550 = vpop.f32.mrb[0].mxu0
        %v551 = vadd.f32 %v469, %v550
        %v552 = vpop.f32.mrb[0].mxu0
        %v553 = vpop.f32.mrb[0].mxu0
        %v554 = vadd.f32 %v469, %v553
        %v555 = vpop.f32.mrb[0].mxu0
        %556 = vmatprep.mubr.bf16.mxu0 0
        %557 = vmatmul.mubr.bf16.gmra.mrb[0].mxu0 %v494
        %v558 = vpop.f32.mrb[0].mxu0
        %v559 = vadd.f32 %v469, %v558
        %v560 = vpop.f32.mrb[0].mxu0
        %v561 = vpop.f32.mrb[0].mxu0
        %v562 = vadd.f32 %v469, %v561
        %v563 = vpop.f32.mrb[0].mxu0
        %564 = vdwg.mxu0
        %v565 = vmax.f32 %v535, 0.0
        %v566 = vmax.f32 %v538, 0.0
        %v567 = vmax.f32 %v543, 0.0
        %v568 = vmax.f32 %v546, 0.0
        %v569 = vmax.f32 %v551, 0.0
        %v570 = vmax.f32 %v554, 0.0
        %v571 = vmax.f32 %v559, 0.0
        %v572 = vmax.f32 %v562, 0.0
        %v573 = vld [vmem:[%s326] sm:$0xff]
        %v574 = vld [vmem:[%s326 + $0x8] sm:$0xff]
        %v575 = vunpack.c.0.s8 %v573
        %v576 = vunpack.c.1.s8 %v573
        %v577 = vunpack.c.2.s8 %v573
        %v578 = vunpack.c.3.s8 %v573
        %v579 = vunpack.c.0.s8 %v574
        %v580 = vunpack.c.1.s8 %v574
        %v581 = vunpack.c.2.s8 %v574
        %v582 = vunpack.c.3.s8 %v574
        %v583 = vld [vmem:[%s6] sm:$0x3]
        %v584 = vld [vmem:[%s7] sm:$0x1]
        %v585 = vpack.c.bf16 %v566, %v565
        %v586 = vpack.c.bf16 %v568, %v567
        %v587 = vpack.c.bf16 %v570, %v569
        %v588 = vpack.c.bf16 %v572, %v571
        %v590 = vlaneseq
        %v591 = vshrl.u32 %v590, 7
        %v592 = vsub.s32 0, %v591
        %v593 = vrot.slane %v584, %v592
        %v596 = vsel %vm483, %v585, 0
        %v599 = vsel %vm483, %v586, 0
        %v602 = vsel %vm483, %v587, 0
        %v605 = vsel %vm483, %v588, 0
        %v608 = vsel %vm496, %v583, 0
        %610 = vmatprep.subr.bf16.mxu0 0
        %611 = vmatpush1.bf16.msra.mxu0 %v608
        %612 = vmatprep.subr.bf16.mxu0 0
        %613 = vmatpush1.bf16.msra.mxu0 0
        %614 = vmatprep.subr.bf16.mxu0 0
        %615 = vmatpush1.bf16.msra.mxu0 0
        %616 = vmatprep.subr.bf16.mxu0 0
        %617 = vmatpush1.bf16.msra.mxu0 0
        %618 = vmatprep.subr.bf16.mxu0 0
        %619 = vmatpush1.bf16.msra.mxu0 0
        %620 = vmatprep.subr.bf16.mxu0 0
        %621 = vmatpush1.bf16.msra.mxu0 0
        %622 = vmatprep.subr.bf16.mxu0 0
        %623 = vmatpush1.bf16.msra.mxu0 0
        %624 = vmatprep.subr.bf16.mxu0 0
        %625 = vmatpush1.bf16.msra.mxu0 0
        %626 = vmatprep.subr.bf16.mxu0 0
        %627 = vmatpush1.bf16.msra.mxu0 0
        %628 = vmatprep.subr.bf16.mxu0 0
        %629 = vmatpush1.bf16.msra.mxu0 0
        %630 = vmatprep.subr.bf16.mxu0 0
        %631 = vmatpush1.bf16.msra.mxu0 0
        %632 = vmatprep.subr.bf16.mxu0 0
        %633 = vmatpush1.bf16.msra.mxu0 0
        %634 = vmatprep.subr.bf16.mxu0 0
        %635 = vmatpush1.bf16.msra.mxu0 0
        %636 = vmatprep.subr.bf16.mxu0 0
        %637 = vmatpush1.bf16.msra.mxu0 0
        %638 = vmatprep.subr.bf16.mxu0 0
        %639 = vmatpush1.bf16.msra.mxu0 0
        %640 = vmatprep.subr.bf16.mxu0 0
        %641 = vmatpush1.bf16.msra.mxu0 0
        %642 = vmatprep.mubr.bf16.mxu0 0
        %643 = vmatmul.mubr.bf16.gmra.mrb[0].mxu0 %v596
        %v644 = vpop.f32.mrb[0].mxu0
        %v645 = vadd.f32 %v593, %v644
        %v646 = vpop.f32.mrb[0].mxu0
        %v647 = vpop.f32.mrb[0].mxu0
        %v648 = vadd.f32 %v593, %v647
        %v649 = vpop.f32.mrb[0].mxu0
        %650 = vmatprep.mubr.bf16.mxu0 0
        %651 = vmatmul.mubr.bf16.gmra.mrb[0].mxu0 %v599
        %v652 = vpop.f32.mrb[0].mxu0
        %v653 = vadd.f32 %v593, %v652
        %v654 = vpop.f32.mrb[0].mxu0
        %v655 = vpop.f32.mrb[0].mxu0
        %v656 = vadd.f32 %v593, %v655
        %v657 = vpop.f32.mrb[0].mxu0
        %658 = vmatprep.mubr.bf16.mxu0 0
        %659 = vmatmul.mubr.bf16.gmra.mrb[0].mxu0 %v602
        %v660 = vpop.f32.mrb[0].mxu0
        %v661 = vadd.f32 %v593, %v660
        %v662 = vpop.f32.mrb[0].mxu0
        %v663 = vpop.f32.mrb[0].mxu0
        %v664 = vadd.f32 %v593, %v663
        %v665 = vpop.f32.mrb[0].mxu0
        %666 = vmatprep.mubr.bf16.mxu0 0
        %667 = vmatmul.mubr.bf16.gmra.mrb[0].mxu0 %v605
        %v668 = vpop.f32.mrb[0].mxu0
        %v669 = vadd.f32 %v593, %v668
        %v670 = vpop.f32.mrb[0].mxu0
        %v671 = vpop.f32.mrb[0].mxu0
        %v672 = vadd.f32 %v593, %v671
        %v673 = vpop.f32.mrb[0].mxu0
        %674 = vdwg.mxu0
        %v675 = vmax.f32 %v645, 0.0
        %v676 = vmax.f32 %v648, 0.0
        %v677 = vmax.f32 %v653, 0.0
        %v678 = vmax.f32 %v656, 0.0
        %v679 = vmax.f32 %v661, 0.0
        %v680 = vmax.f32 %v664, 0.0
        %v681 = vmax.f32 %v669, 0.0
        %v682 = vmax.f32 %v672, 0.0
        %vm683 = vcmp.eq.s32.totalorder %v575, 0
        %vm684 = vcmp.eq.s32.totalorder %v576, 0
        %vm685 = vcmp.eq.s32.totalorder %v577, 0
        %vm686 = vcmp.eq.s32.totalorder %v578, 0
        %vm687 = vcmp.eq.s32.totalorder %v579, 0
        %vm688 = vcmp.eq.s32.totalorder %v580, 0
        %vm689 = vcmp.eq.s32.totalorder %v581, 0
        %vm690 = vcmp.eq.s32.totalorder %v582, 0
        %v691 = vsel %vm683, %v421, 0.0
        %v692 = vsel %vm684, %v424, 0.0
        %v693 = vsel %vm685, %v429, 0.0
        %v694 = vsel %vm686, %v432, 0.0
        %v695 = vsel %vm687, %v437, 0.0
        %v696 = vsel %vm688, %v440, 0.0
        %v697 = vsel %vm689, %v445, 0.0
        %v698 = vsel %vm690, %v448, 0.0
        %v699 = vadd.f32 %v691, %v675
        %v700 = vadd.f32 %v692, %v676
        %v701 = vadd.f32 %v693, %v677
        %v702 = vadd.f32 %v694, %v678
        %v703 = vadd.f32 %v695, %v679
        %v704 = vadd.f32 %v696, %v680
        %v705 = vadd.f32 %v697, %v681
        %v706 = vadd.f32 %v698, %v682
        %v707 = vmax.f32 %v699, 0.0
        %v708 = vmax.f32 %v700, 0.0
        %v709 = vmax.f32 %v701, 0.0
        %v710 = vmax.f32 %v702, 0.0
        %v711 = vmax.f32 %v703, 0.0
        %v712 = vmax.f32 %v704, 0.0
        %v713 = vmax.f32 %v705, 0.0
        %v714 = vmax.f32 %v706, 0.0
        %719 = vrot.lane.b32.xlu0 %v585, 124
        %v720 = vpop.permute.xlu0 %719
        %721 = vrot.lane.b32.xlu0 %v586, 124
        %v722 = vpop.permute.xlu0 %721
        %723 = vrot.lane.b32.xlu0 %v587, 124
        %v724 = vpop.permute.xlu0 %723
        %725 = vrot.lane.b32.xlu0 %v588, 124
        %v726 = vpop.permute.xlu0 %725
        %v728 = vsel %vm483, %v720, 0
        %v731 = vsel %vm483, %v722, 0
        %v734 = vsel %vm483, %v724, 0
        %v737 = vsel %vm483, %v726, 0
        %739 = vmatprep.subr.bf16.mxu0 0
        %740 = vmatpush1.bf16.msra.mxu0 %v608
        %741 = vmatprep.subr.bf16.mxu0 0
        %742 = vmatpush1.bf16.msra.mxu0 0
        %743 = vmatprep.subr.bf16.mxu0 0
        %744 = vmatpush1.bf16.msra.mxu0 0
        %745 = vmatprep.subr.bf16.mxu0 0
        %746 = vmatpush1.bf16.msra.mxu0 0
        %747 = vmatprep.subr.bf16.mxu0 0
        %748 = vmatpush1.bf16.msra.mxu0 0
        %749 = vmatprep.subr.bf16.mxu0 0
        %750 = vmatpush1.bf16.msra.mxu0 0
        %751 = vmatprep.subr.bf16.mxu0 0
        %752 = vmatpush1.bf16.msra.mxu0 0
        %753 = vmatprep.subr.bf16.mxu0 0
        %754 = vmatpush1.bf16.msra.mxu0 0
        %755 = vmatprep.subr.bf16.mxu0 0
        %756 = vmatpush1.bf16.msra.mxu0 0
        %757 = vmatprep.subr.bf16.mxu0 0
        %758 = vmatpush1.bf16.msra.mxu0 0
        %759 = vmatprep.subr.bf16.mxu0 0
        %760 = vmatpush1.bf16.msra.mxu0 0
        %761 = vmatprep.subr.bf16.mxu0 0
        %762 = vmatpush1.bf16.msra.mxu0 0
        %763 = vmatprep.subr.bf16.mxu0 0
        %764 = vmatpush1.bf16.msra.mxu0 0
        %765 = vmatprep.subr.bf16.mxu0 0
        %766 = vmatpush1.bf16.msra.mxu0 0
        %767 = vmatprep.subr.bf16.mxu0 0
        %768 = vmatpush1.bf16.msra.mxu0 0
        %769 = vmatprep.subr.bf16.mxu0 0
        %770 = vmatpush1.bf16.msra.mxu0 0
        %771 = vmatprep.mubr.bf16.mxu0 0
        %772 = vmatmul.mubr.bf16.gmra.mrb[0].mxu0 %v728
        %v773 = vpop.f32.mrb[0].mxu0
        %v774 = vadd.f32 %v593, %v773
        %v775 = vpop.f32.mrb[0].mxu0
        %v776 = vpop.f32.mrb[0].mxu0
        %v777 = vadd.f32 %v593, %v776
        %v778 = vpop.f32.mrb[0].mxu0
        %779 = vmatprep.mubr.bf16.mxu0 0
        %780 = vmatmul.mubr.bf16.gmra.mrb[0].mxu0 %v731
        %v781 = vpop.f32.mrb[0].mxu0
        %v782 = vadd.f32 %v593, %v781
        %v783 = vpop.f32.mrb[0].mxu0
        %v784 = vpop.f32.mrb[0].mxu0
        %v785 = vadd.f32 %v593, %v784
        %v786 = vpop.f32.mrb[0].mxu0
        %787 = vmatprep.mubr.bf16.mxu0 0
        %788 = vmatmul.mubr.bf16.gmra.mrb[0].mxu0 %v734
        %v789 = vpop.f32.mrb[0].mxu0
        %v790 = vadd.f32 %v593, %v789
        %v791 = vpop.f32.mrb[0].mxu0
        %v792 = vpop.f32.mrb[0].mxu0
        %v793 = vadd.f32 %v593, %v792
        %v794 = vpop.f32.mrb[0].mxu0
        %795 = vmatprep.mubr.bf16.mxu0 0
        %796 = vmatmul.mubr.bf16.gmra.mrb[0].mxu0 %v737
        %v797 = vpop.f32.mrb[0].mxu0
        %v798 = vadd.f32 %v593, %v797
        %v799 = vpop.f32.mrb[0].mxu0
        %v800 = vpop.f32.mrb[0].mxu0
        %v801 = vadd.f32 %v593, %v800
        %v802 = vpop.f32.mrb[0].mxu0
        %803 = vdwg.mxu0
        %v804 = vmax.f32 %v774, 0.0
        %v805 = vmax.f32 %v777, 0.0
        %v806 = vmax.f32 %v782, 0.0
        %v807 = vmax.f32 %v785, 0.0
        %v808 = vmax.f32 %v790, 0.0
        %v809 = vmax.f32 %v793, 0.0
        %v810 = vmax.f32 %v798, 0.0
        %v811 = vmax.f32 %v801, 0.0
        %vm812 = vcmp.eq.s32.totalorder %v575, 1
        %vm813 = vcmp.eq.s32.totalorder %v576, 1
        %vm814 = vcmp.eq.s32.totalorder %v577, 1
        %vm815 = vcmp.eq.s32.totalorder %v578, 1
        %vm816 = vcmp.eq.s32.totalorder %v579, 1
        %vm817 = vcmp.eq.s32.totalorder %v580, 1
        %vm818 = vcmp.eq.s32.totalorder %v581, 1
        %vm819 = vcmp.eq.s32.totalorder %v582, 1
        %v820 = vsel %vm812, %v421, 0.0
        %v821 = vsel %vm813, %v424, 0.0
        %v822 = vsel %vm814, %v429, 0.0
        %v823 = vsel %vm815, %v432, 0.0
        %v824 = vsel %vm816, %v437, 0.0
        %v825 = vsel %vm817, %v440, 0.0
        %v826 = vsel %vm818, %v445, 0.0
        %v827 = vsel %vm819, %v448, 0.0
        %v828 = vadd.f32 %v820, %v804
        %v829 = vadd.f32 %v821, %v805
        %v830 = vadd.f32 %v822, %v806
        %v831 = vadd.f32 %v823, %v807
        %v832 = vadd.f32 %v824, %v808
        %v833 = vadd.f32 %v825, %v809
        %v834 = vadd.f32 %v826, %v810
        %v835 = vadd.f32 %v827, %v811
        %v836 = vmax.f32 %v828, 0.0
        %v837 = vmax.f32 %v829, 0.0
        %v838 = vmax.f32 %v830, 0.0
        %v839 = vmax.f32 %v831, 0.0
        %v840 = vmax.f32 %v832, 0.0
        %v841 = vmax.f32 %v833, 0.0
        %v842 = vmax.f32 %v834, 0.0
        %v843 = vmax.f32 %v835, 0.0
        %844 = vrot.lane.b32.xlu0 %v585, 120
        %v845 = vpop.permute.xlu0 %844
        %846 = vrot.lane.b32.xlu0 %v586, 120
        %v847 = vpop.permute.xlu0 %846
        %848 = vrot.lane.b32.xlu0 %v587, 120
        %v849 = vpop.permute.xlu0 %848
        %850 = vrot.lane.b32.xlu0 %v588, 120
        %v851 = vpop.permute.xlu0 %850
        %v853 = vsel %vm483, %v845, 0
        %v856 = vsel %vm483, %v847, 0
        %v859 = vsel %vm483, %v849, 0
        %v862 = vsel %vm483, %v851, 0
        %864 = vmatprep.subr.bf16.mxu0 0
        %865 = vmatpush1.bf16.msra.mxu0 %v608
        %866 = vmatprep.subr.bf16.mxu0 0
        %867 = vmatpush1.bf16.msra.mxu0 0
        %868 = vmatprep.subr.bf16.mxu0 0
        %869 = vmatpush1.bf16.msra.mxu0 0
        %870 = vmatprep.subr.bf16.mxu0 0
        %871 = vmatpush1.bf16.msra.mxu0 0
        %872 = vmatprep.subr.bf16.mxu0 0
        %873 = vmatpush1.bf16.msra.mxu0 0
        %874 = vmatprep.subr.bf16.mxu0 0
        %875 = vmatpush1.bf16.msra.mxu0 0
        %876 = vmatprep.subr.bf16.mxu0 0
        %877 = vmatpush1.bf16.msra.mxu0 0
        %878 = vmatprep.subr.bf16.mxu0 0
        %879 = vmatpush1.bf16.msra.mxu0 0
        %880 = vmatprep.subr.bf16.mxu0 0
        %881 = vmatpush1.bf16.msra.mxu0 0
        %882 = vmatprep.subr.bf16.mxu0 0
        %883 = vmatpush1.bf16.msra.mxu0 0
        %884 = vmatprep.subr.bf16.mxu0 0
        %885 = vmatpush1.bf16.msra.mxu0 0
        %886 = vmatprep.subr.bf16.mxu0 0
        %887 = vmatpush1.bf16.msra.mxu0 0
        %888 = vmatprep.subr.bf16.mxu0 0
        %889 = vmatpush1.bf16.msra.mxu0 0
        %890 = vmatprep.subr.bf16.mxu0 0
        %891 = vmatpush1.bf16.msra.mxu0 0
        %892 = vmatprep.subr.bf16.mxu0 0
        %893 = vmatpush1.bf16.msra.mxu0 0
        %894 = vmatprep.subr.bf16.mxu0 0
        %895 = vmatpush1.bf16.msra.mxu0 0
        %896 = vmatprep.mubr.bf16.mxu0 0
        %897 = vmatmul.mubr.bf16.gmra.mrb[0].mxu0 %v853
        %v898 = vpop.f32.mrb[0].mxu0
        %v899 = vadd.f32 %v593, %v898
        %v900 = vpop.f32.mrb[0].mxu0
        %v901 = vpop.f32.mrb[0].mxu0
        %v902 = vadd.f32 %v593, %v901
        %v903 = vpop.f32.mrb[0].mxu0
        %904 = vmatprep.mubr.bf16.mxu0 0
        %905 = vmatmul.mubr.bf16.gmra.mrb[0].mxu0 %v856
        %v906 = vpop.f32.mrb[0].mxu0
        %v907 = vadd.f32 %v593, %v906
        %v908 = vpop.f32.mrb[0].mxu0
        %v909 = vpop.f32.mrb[0].mxu0
        %v910 = vadd.f32 %v593, %v909
        %v911 = vpop.f32.mrb[0].mxu0
        %912 = vmatprep.mubr.bf16.mxu0 0
        %913 = vmatmul.mubr.bf16.gmra.mrb[0].mxu0 %v859
        %v914 = vpop.f32.mrb[0].mxu0
        %v915 = vadd.f32 %v593, %v914
        %v916 = vpop.f32.mrb[0].mxu0
        %v917 = vpop.f32.mrb[0].mxu0
        %v918 = vadd.f32 %v593, %v917
        %v919 = vpop.f32.mrb[0].mxu0
        %920 = vmatprep.mubr.bf16.mxu0 0
        %921 = vmatmul.mubr.bf16.gmra.mrb[0].mxu0 %v862
        %v922 = vpop.f32.mrb[0].mxu0
        %v923 = vadd.f32 %v593, %v922
        %v924 = vpop.f32.mrb[0].mxu0
        %v925 = vpop.f32.mrb[0].mxu0
        %v926 = vadd.f32 %v593, %v925
        %v927 = vpop.f32.mrb[0].mxu0
        %928 = vdwg.mxu0
        %v929 = vmax.f32 %v899, 0.0
        %v930 = vmax.f32 %v902, 0.0
        %v931 = vmax.f32 %v907, 0.0
        %v932 = vmax.f32 %v910, 0.0
        %v933 = vmax.f32 %v915, 0.0
        %v934 = vmax.f32 %v918, 0.0
        %v935 = vmax.f32 %v923, 0.0
        %v936 = vmax.f32 %v926, 0.0
        %vm937 = vcmp.eq.s32.totalorder %v575, 2
        %vm938 = vcmp.eq.s32.totalorder %v576, 2
        %vm939 = vcmp.eq.s32.totalorder %v577, 2
        %vm940 = vcmp.eq.s32.totalorder %v578, 2
        %vm941 = vcmp.eq.s32.totalorder %v579, 2
        %vm942 = vcmp.eq.s32.totalorder %v580, 2
        %vm943 = vcmp.eq.s32.totalorder %v581, 2
        %vm944 = vcmp.eq.s32.totalorder %v582, 2
        %v945 = vsel %vm937, %v421, 0.0
        %v946 = vsel %vm938, %v424, 0.0
        %v947 = vsel %vm939, %v429, 0.0
        %v948 = vsel %vm940, %v432, 0.0
        %v949 = vsel %vm941, %v437, 0.0
        %v950 = vsel %vm942, %v440, 0.0
        %v951 = vsel %vm943, %v445, 0.0
        %v952 = vsel %vm944, %v448, 0.0
        %v953 = vadd.f32 %v945, %v929
        %v954 = vadd.f32 %v946, %v930
        %v955 = vadd.f32 %v947, %v931
        %v956 = vadd.f32 %v948, %v932
        %v957 = vadd.f32 %v949, %v933
        %v958 = vadd.f32 %v950, %v934
        %v959 = vadd.f32 %v951, %v935
        %v960 = vadd.f32 %v952, %v936
        %v961 = vmax.f32 %v953, 0.0
        %v962 = vmax.f32 %v954, 0.0
        %v963 = vmax.f32 %v955, 0.0
        %v964 = vmax.f32 %v956, 0.0
        %v965 = vmax.f32 %v957, 0.0
        %v966 = vmax.f32 %v958, 0.0
        %v967 = vmax.f32 %v959, 0.0
        %v968 = vmax.f32 %v960, 0.0
        %969 = vrot.lane.b32.xlu0 %v585, 116
        %v970 = vpop.permute.xlu0 %969
        %971 = vrot.lane.b32.xlu0 %v586, 116
        %v972 = vpop.permute.xlu0 %971
        %973 = vrot.lane.b32.xlu0 %v587, 116
        %v974 = vpop.permute.xlu0 %973
        %975 = vrot.lane.b32.xlu0 %v588, 116
        %v976 = vpop.permute.xlu0 %975
        %v978 = vsel %vm483, %v970, 0
        %v981 = vsel %vm483, %v972, 0
        %v984 = vsel %vm483, %v974, 0
        %v987 = vsel %vm483, %v976, 0
        %989 = vmatprep.subr.bf16.mxu0 0
        %990 = vmatpush1.bf16.msra.mxu0 %v608
        %991 = vmatprep.subr.bf16.mxu0 0
        %992 = vmatpush1.bf16.msra.mxu0 0
        %993 = vmatprep.subr.bf16.mxu0 0
        %994 = vmatpush1.bf16.msra.mxu0 0
        %995 = vmatprep.subr.bf16.mxu0 0
        %996 = vmatpush1.bf16.msra.mxu0 0
        %997 = vmatprep.subr.bf16.mxu0 0
        %998 = vmatpush1.bf16.msra.mxu0 0
        %999 = vmatprep.subr.bf16.mxu0 0
        %1000 = vmatpush1.bf16.msra.mxu0 0
        %1001 = vmatprep.subr.bf16.mxu0 0
        %1002 = vmatpush1.bf16.msra.mxu0 0
        %1003 = vmatprep.subr.bf16.mxu0 0
        %1004 = vmatpush1.bf16.msra.mxu0 0
        %1005 = vmatprep.subr.bf16.mxu0 0
        %1006 = vmatpush1.bf16.msra.mxu0 0
        %1007 = vmatprep.subr.bf16.mxu0 0
        %1008 = vmatpush1.bf16.msra.mxu0 0
        %1009 = vmatprep.subr.bf16.mxu0 0
        %1010 = vmatpush1.bf16.msra.mxu0 0
        %1011 = vmatprep.subr.bf16.mxu0 0
        %1012 = vmatpush1.bf16.msra.mxu0 0
        %1013 = vmatprep.subr.bf16.mxu0 0
        %1014 = vmatpush1.bf16.msra.mxu0 0
        %1015 = vmatprep.subr.bf16.mxu0 0
        %1016 = vmatpush1.bf16.msra.mxu0 0
        %1017 = vmatprep.subr.bf16.mxu0 0
        %1018 = vmatpush1.bf16.msra.mxu0 0
        %1019 = vmatprep.subr.bf16.mxu0 0
        %1020 = vmatpush1.bf16.msra.mxu0 0
        %1021 = vmatprep.mubr.bf16.mxu0 0
        %1022 = vmatmul.mubr.bf16.gmra.mrb[0].mxu0 %v978
        %v1023 = vpop.f32.mrb[0].mxu0
        %v1024 = vadd.f32 %v593, %v1023
        %v1025 = vpop.f32.mrb[0].mxu0
        %v1026 = vpop.f32.mrb[0].mxu0
        %v1027 = vadd.f32 %v593, %v1026
        %v1028 = vpop.f32.mrb[0].mxu0
        %1029 = vmatprep.mubr.bf16.mxu0 0
        %1030 = vmatmul.mubr.bf16.gmra.mrb[0].mxu0 %v981
        %v1031 = vpop.f32.mrb[0].mxu0
        %v1032 = vadd.f32 %v593, %v1031
        %v1033 = vpop.f32.mrb[0].mxu0
        %v1034 = vpop.f32.mrb[0].mxu0
        %v1035 = vadd.f32 %v593, %v1034
        %v1036 = vpop.f32.mrb[0].mxu0
        %1037 = vmatprep.mubr.bf16.mxu0 0
        %1038 = vmatmul.mubr.bf16.gmra.mrb[0].mxu0 %v984
        %v1039 = vpop.f32.mrb[0].mxu0
        %v1040 = vadd.f32 %v593, %v1039
        %v1041 = vpop.f32.mrb[0].mxu0
        %v1042 = vpop.f32.mrb[0].mxu0
        %v1043 = vadd.f32 %v593, %v1042
        %v1044 = vpop.f32.mrb[0].mxu0
        %1045 = vmatprep.mubr.bf16.mxu0 0
        %1046 = vmatmul.mubr.bf16.gmra.mrb[0].mxu0 %v987
        %v1047 = vpop.f32.mrb[0].mxu0
        %v1048 = vadd.f32 %v593, %v1047
        %v1049 = vpop.f32.mrb[0].mxu0
        %v1050 = vpop.f32.mrb[0].mxu0
        %v1051 = vadd.f32 %v593, %v1050
        %v1052 = vpop.f32.mrb[0].mxu0
        %1053 = vdwg.mxu0
        %v1054 = vmax.f32 %v1024, 0.0
        %v1055 = vmax.f32 %v1027, 0.0
        %v1056 = vmax.f32 %v1032, 0.0
        %v1057 = vmax.f32 %v1035, 0.0
        %v1058 = vmax.f32 %v1040, 0.0
        %v1059 = vmax.f32 %v1043, 0.0
        %v1060 = vmax.f32 %v1048, 0.0
        %v1061 = vmax.f32 %v1051, 0.0
        %vm1062 = vcmp.eq.s32.totalorder %v575, 3
        %vm1063 = vcmp.eq.s32.totalorder %v576, 3
        %vm1064 = vcmp.eq.s32.totalorder %v577, 3
        %vm1065 = vcmp.eq.s32.totalorder %v578, 3
        %vm1066 = vcmp.eq.s32.totalorder %v579, 3
        %vm1067 = vcmp.eq.s32.totalorder %v580, 3
        %vm1068 = vcmp.eq.s32.totalorder %v581, 3
        %vm1069 = vcmp.eq.s32.totalorder %v582, 3
        %v1070 = vsel %vm1062, %v421, 0.0
        %v1071 = vsel %vm1063, %v424, 0.0
        %v1072 = vsel %vm1064, %v429, 0.0
        %v1073 = vsel %vm1065, %v432, 0.0
        %v1074 = vsel %vm1066, %v437, 0.0
        %v1075 = vsel %vm1067, %v440, 0.0
        %v1076 = vsel %vm1068, %v445, 0.0
        %v1077 = vsel %vm1069, %v448, 0.0
        %v1078 = vadd.f32 %v1070, %v1054
        %v1079 = vadd.f32 %v1071, %v1055
        %v1080 = vadd.f32 %v1072, %v1056
        %v1081 = vadd.f32 %v1073, %v1057
        %v1082 = vadd.f32 %v1074, %v1058
        %v1083 = vadd.f32 %v1075, %v1059
        %v1084 = vadd.f32 %v1076, %v1060
        %v1085 = vadd.f32 %v1077, %v1061
        %v1086 = vmax.f32 %v1078, 0.0
        %v1087 = vmax.f32 %v1079, 0.0
        %v1088 = vmax.f32 %v1080, 0.0
        %v1089 = vmax.f32 %v1081, 0.0
        %v1090 = vmax.f32 %v1082, 0.0
        %v1091 = vmax.f32 %v1083, 0.0
        %v1092 = vmax.f32 %v1084, 0.0
        %v1093 = vmax.f32 %v1085, 0.0
        %1102 = vrot.lane.b32.xlu0 %v836, 32
        %v1103 = vpop.permute.xlu0 %1102
        %1104 = vrot.lane.b32.xlu0 %v837, 32
        %v1105 = vpop.permute.xlu0 %1104
        %1106 = vrot.lane.b32.xlu0 %v838, 32
        %v1107 = vpop.permute.xlu0 %1106
        %1108 = vrot.lane.b32.xlu0 %v839, 32
        %v1109 = vpop.permute.xlu0 %1108
        %1110 = vrot.lane.b32.xlu0 %v840, 32
        %v1111 = vpop.permute.xlu0 %1110
        %1112 = vrot.lane.b32.xlu0 %v841, 32
        %v1113 = vpop.permute.xlu0 %1112
        %1114 = vrot.lane.b32.xlu0 %v842, 32
        %v1115 = vpop.permute.xlu0 %1114
        %1116 = vrot.lane.b32.xlu0 %v843, 32
        %v1117 = vpop.permute.xlu0 %1116
        %1134 = vrot.lane.b32.xlu0 %v961, 64
        %v1135 = vpop.permute.xlu0 %1134
        %1136 = vrot.lane.b32.xlu0 %v962, 64
        %v1137 = vpop.permute.xlu0 %1136
        %1138 = vrot.lane.b32.xlu0 %v963, 64
        %v1139 = vpop.permute.xlu0 %1138
        %1140 = vrot.lane.b32.xlu0 %v964, 64
        %v1141 = vpop.permute.xlu0 %1140
        %1142 = vrot.lane.b32.xlu0 %v965, 64
        %v1143 = vpop.permute.xlu0 %1142
        %1144 = vrot.lane.b32.xlu0 %v966, 64
        %v1145 = vpop.permute.xlu0 %1144
        %1146 = vrot.lane.b32.xlu0 %v967, 64
        %v1147 = vpop.permute.xlu0 %1146
        %1148 = vrot.lane.b32.xlu0 %v968, 64
        %v1149 = vpop.permute.xlu0 %1148
        %1166 = vrot.lane.b32.xlu0 %v1086, 96
        %v1167 = vpop.permute.xlu0 %1166
        %1168 = vrot.lane.b32.xlu0 %v1087, 96
        %v1169 = vpop.permute.xlu0 %1168
        %1170 = vrot.lane.b32.xlu0 %v1088, 96
        %v1171 = vpop.permute.xlu0 %1170
        %1172 = vrot.lane.b32.xlu0 %v1089, 96
        %v1173 = vpop.permute.xlu0 %1172
        %1174 = vrot.lane.b32.xlu0 %v1090, 96
        %v1175 = vpop.permute.xlu0 %1174
        %1176 = vrot.lane.b32.xlu0 %v1091, 96
        %v1177 = vpop.permute.xlu0 %1176
        %1178 = vrot.lane.b32.xlu0 %v1092, 96
        %v1179 = vpop.permute.xlu0 %1178
        %1180 = vrot.lane.b32.xlu0 %v1093, 96
        %v1181 = vpop.permute.xlu0 %1180
        %vm1190 = vcmask 261120
        %v1191 = vsel %vm1190, %v707, %v1103
        %v1192 = vsel %vm1190, %v708, %v1105
        %v1193 = vsel %vm1190, %v709, %v1107
        %v1194 = vsel %vm1190, %v710, %v1109
        %v1195 = vsel %vm1190, %v711, %v1111
        %v1196 = vsel %vm1190, %v712, %v1113
        %v1197 = vsel %vm1190, %v713, %v1115
        %v1198 = vsel %vm1190, %v714, %v1117
        %vm1199 = vcmask 523264
        %v1200 = vsel %vm1199, %v1191, %v1135
        %v1201 = vsel %vm1199, %v1192, %v1137
        %v1202 = vsel %vm1199, %v1193, %v1139
        %v1203 = vsel %vm1199, %v1194, %v1141
        %v1204 = vsel %vm1199, %v1195, %v1143
        %v1205 = vsel %vm1199, %v1196, %v1145
        %v1206 = vsel %vm1199, %v1197, %v1147
        %v1207 = vsel %vm1199, %v1198, %v1149
        %vm1208 = vcmask 785408
        %v1209 = vsel %vm1208, %v1200, %v1167
        %v1210 = vsel %vm1208, %v1201, %v1169
        %v1211 = vsel %vm1208, %v1202, %v1171
        %v1212 = vsel %vm1208, %v1203, %v1173
        %v1213 = vsel %vm1208, %v1204, %v1175
        %v1214 = vsel %vm1208, %v1205, %v1177
        %v1215 = vsel %vm1208, %v1206, %v1179
        %v1216 = vsel %vm1208, %v1207, %v1181
        %v1217 = vpack.c.bf16 %v1210, %v1209
        %v1218 = vpack.c.bf16 %v1212, %v1211
        %v1219 = vpack.c.bf16 %v1214, %v1213
        %v1220 = vpack.c.bf16 %v1216, %v1215
        %v1225 = vunpack.c.l.b16 %v1217
        %v1226 = vunpack.c.h.b16 %v1217
        %v1227 = vunpack.c.l.b16 %v1218
        %v1228 = vunpack.c.h.b16 %v1218
        %v1229 = vunpack.c.l.b16 %v1219
        %v1230 = vunpack.c.h.b16 %v1219
        %v1231 = vunpack.c.l.b16 %v1220
        %v1232 = vunpack.c.h.b16 %v1220
        %v1233 = vpack.c.b16 %v1225, %v1225
        %v1234 = vpack.c.b16 %v1226, %v1226
        %v1235 = vpack.c.b16 %v1227, %v1227
        %v1236 = vpack.c.b16 %v1228, %v1228
        %v1237 = vpack.c.b16 %v1229, %v1229
        %v1238 = vpack.c.b16 %v1230, %v1230
        %v1239 = vpack.c.b16 %v1231, %v1231
        %v1240 = vpack.c.b16 %v1232, %v1232
        %1249 = vst [vmem:[%s315] sm:$0xf] %v1233
        %1250 = vst [vmem:[%s315 + $0x4] sm:$0xf] %v1234
        %1251 = vst [vmem:[%s315 + $0x8] sm:$0xf] %v1235
        %1252 = vst [vmem:[%s315 + $0xc] sm:$0xf] %v1236
        %1253 = vst [vmem:[%s315 + $0x10] sm:$0xf] %v1237
        %1254 = vst [vmem:[%s315 + $0x14] sm:$0xf] %v1238
        %1255 = vst [vmem:[%s315 + $0x18] sm:$0xf] %v1239
        %1256 = vst [vmem:[%s315 + $0x1c] sm:$0xf] %v1240
        %s1257 = sand.u32 %s208, 1
        %s1258 = scalar_lea.sflag [#allocation3], %s1257
        %s1259 = sand.u32 %s208, 1
        %s1260 = smul.addr %s1259, 32
        %s1261 = scalar_lea.vmem [#allocation2], %s1260
        // Predicated region
        $region53: #{tpu_custom_call.1} parent=51 // pred_check
          %p1262 = pneg %p218
        $region54: #{tpu_custom_call.1} parent=51 // pred_check_branch
          %1264 = sbr.rel (%p1262) target = $region56
        $region55: #{tpu_custom_call.1} parent=51 // pred_region
          %s1265 = smul.u32 8, %s22
          %s1267 = ssub.s32 512, 512
          %1268 = vsyncadd %s1258, %s1267
          %s1269 = smul.addr %s1265, 64
          %s1270 = scalar_lea.hbm %s8, %s1269
          %s1271 = sshll.u32 %s1261, 4
          %s1272 = int_to_ptr.vmem [resolvable:$true] %s1271
          %1277 = dma.vmem_to_hbm [thread:$0]  %s1272, 512, %s1270, %s1258, 64, 64, 4
        $region56: #{tpu_custom_call.1} parent=51 // pred_fallthru
          _
      $region52: #{tpu_custom_call.1} parent=5 // pred_fallthru
        _
      %p1278 = scmp.le.s32.totalorder 2, %s17
      // Predicated region
      $region57: #{tpu_custom_call.1} parent=5 // pred_check
        %p1279 = pneg %p1278
      $region58: #{tpu_custom_call.1} parent=5 // pred_check_branch
        %1281 = sbr.rel (%p1279) target = $region60
      $region59: #{tpu_custom_call.1} parent=5 // pred_region
        %s1282 = ssub.s32 %s17, 2
        // Predicated region
        $region61: #{tpu_custom_call.1} parent=59 // pred_check
          %p1283 = pneg %p224
        $region62: #{tpu_custom_call.1} parent=59 // pred_check_branch
          %1285 = sbr.rel (%p1283) target = $region64
        $region63: #{tpu_custom_call.1} parent=59 // pred_region
          %s1286 = sand.u32 %s209, 1
          %s1287 = scalar_lea.sflag [#allocation3], %s1286
          %s1288 = sand.u32 %s209, 1
          %s1289 = smul.addr %s1288, 32
          %s1290 = scalar_lea.vmem [#allocation2], %s1289
          %1291 = dma.done %s1287, 512
        $region64: #{tpu_custom_call.1} parent=59 // pred_fallthru
          _
      $region60: #{tpu_custom_call.1} parent=5 // pred_fallthru
        _
    $region6: #{tpu_custom_call.1} parent=1 // loop_footer
      %s21 = sadd.s32 1, %s17
    $region7: #{tpu_custom_call.1} parent=1 // loop_footer_branch
      %16 = sbr.rel target = $region3
    $region8: #{tpu_custom_call.1} parent=1 // loop_exit
      _
    %1292 = vsyncpa [#allocation3], 1
    %s1293 = scalar_lea.sflag [#allocation3], 1
    %1294 = vsyncpa %s1293, 1

</llo_original>
